<compile_context>
chip_gen: v6e
topology: v6e:2x2x1
jax: 0.10.0
libtpu: 0.0.40
codegen_flags: <defaults>
</compile_context>

<pallas_src>
import jax
import jax.numpy as jnp
from jax.experimental import pallas as pl
from jax.experimental.pallas import tpu as pltpu


# ----------------------------- small helpers --------------------------------

def _vmem_budgets():
    """Return (vmem_limit_bytes, per-block byte budget), generation aware."""
    try:
        cap = int(pltpu.get_tpu_info().vmem_capacity_bytes)
    except Exception:
        cap = 64 * 1024 * 1024                  # conservative (v7x-sized) fallback
    if cap >= 128 * 1024 * 1024:                # v5e / v6e: 128 MiB physical VMEM
        return 96 * 1024 * 1024, 14 * 1024 * 1024
    # v7x (64 MiB physical) or unknown
    return 48 * 1024 * 1024, 8 * 1024 * 1024


def _largest_divisor(n, cap, multiple_of):
    """Largest d with d | n, d <= cap, d % multiple_of == 0; None if none."""
    cap = min(n, cap)
    d = (cap // multiple_of) * multiple_of
    while d >= multiple_of:
        if n % d == 0:
            return d
        d -= multiple_of
    return None


def _fast_sigmoid(z):
    """sigmoid with EUP exp + approx reciprocal + one Newton step."""
    z = jnp.clip(z, -30.0, 30.0)
    d = 1.0 + jnp.exp(-z)
    r = pl.reciprocal(d, approx=True)
    return r * (2.0 - d * r)


# --------------------------- fused single-pass path --------------------------

def _fused_call(x, w1f, w2f, b_tile, vmem_limit):
    B, C, L = x.shape
    H = w1f.shape[0]
    nb = B // b_tile
    inv_l = 1.0 / float(L)

    def kernel(x_ref, w1_ref, w2_ref, out_ref):
        w1 = w1_ref[...]                                       # (H, C) f32
        w2 = w2_ref[...]                                       # (C, H) f32
        for b in range(b_tile):                                # static unroll (<= 8)
            xb = x_ref[b]                                      # (C, L), input dtype
            # f32 sum accumulation / native-dtype max: no f32 copy of the tile.
            avg = jnp.sum(xb, axis=-1, keepdims=True, dtype=jnp.float32) * inv_l
            mxv = jnp.max(xb, axis=-1, keepdims=True).astype(jnp.float32)
            ha = jnp.maximum(
                jnp.dot(w1, avg, preferred_element_type=jnp.float32), 0.0)  # (H, 1)
            hm = jnp.maximum(
                jnp.dot(w1, mxv, preferred_element_type=jnp.float32), 0.0)
            logits = (jnp.dot(w2, ha, preferred_element_type=jnp.float32)
                      + jnp.dot(w2, hm, preferred_element_type=jnp.float32))  # (C, 1)
            att = _fast_sigmoid(logits)                        # (C, 1) f32
            # Gate in the input dtype (<= 1 ulp(bf16) vs gating in f32).
            out_ref[b] = (xb * att.astype(xb.dtype)).astype(out_ref.dtype)

    return pl.pallas_call(
        kernel,
        out_shape=jax.ShapeDtypeStruct((B, C, L), x.dtype),
        grid_spec=pltpu.PrefetchScalarGridSpec(
            num_scalar_prefetch=0,
            grid=(nb,),
            in_specs=[
                pl.BlockSpec((b_tile, C, L), lambda i: (i, 0, 0)),
                pl.BlockSpec((H, C), lambda i: (0, 0)),
                pl.BlockSpec((C, H), lambda i: (0, 0)),
            ],
            out_specs=pl.BlockSpec((b_tile, C, L), lambda i: (i, 0, 0)),
        ),
        compiler_params=pltpu.CompilerParams(
            dimension_semantics=("parallel",),
            vmem_limit_bytes=vmem_limit),
    )(x, w1f, w2f)


# ------------------------- two-pass row-streamed path ------------------------

def _two_pass_call(x, w1f, w2f, row_tile, l_tile, vmem_limit):
    B, C, L = x.shape
    R = B * C
    inv_l = 1.0 / float(L)
    xr = x.reshape(R, L)                 # free view: rows are contiguous in HBM
    nr, nl = R // row_tile, L // l_tile

    # ---- pass 1: per-row sum / max pooling ----------------------------------
    if nl == 1:
        def pool_kernel(x_ref, sum_ref, max_ref):
            xb = x_ref[...]                                    # (row_tile, L)
            sum_ref[...] = jnp.sum(xb, axis=-1, keepdims=True, dtype=jnp.float32)
            max_ref[...] = jnp.max(xb, axis=-1, keepdims=True).astype(jnp.float32)

        pool_grid = (nr,)
        pool_in = [pl.BlockSpec((row_tile, L), lambda r: (r, 0))]
        pool_out = [pl.BlockSpec((row_tile, 1), lambda r: (r, 0))] * 2
        pool_scratch = []
        pool_sem = ("parallel",)
    else:
        def pool_kernel(x_ref, sum_ref, max_ref, sum_acc, max_acc):
            li = pl.program_id(1)
            xb = x_ref[...]                                    # (row_tile, l_tile)
            ps = jnp.sum(xb, axis=-1, keepdims=True, dtype=jnp.float32)
            pm = jnp.max(xb, axis=-1, keepdims=True).astype(jnp.float32)

            @pl.when(li == 0)
            def _():
                sum_acc[...] = ps
                max_acc[...] = pm

            @pl.when(li > 0)
            def _():
                sum_acc[...] = sum_acc[...] + ps
                max_acc[...] = jnp.maximum(max_acc[...], pm)

            @pl.when(li == pl.num_programs(1) - 1)
            def _():
                sum_ref[...] = sum_acc[...]
                max_ref[...] = max_acc[...]

        pool_grid = (nr, nl)
        pool_in = [pl.BlockSpec((row_tile, l_tile), lambda r, l: (r, l))]
        pool_out = [pl.BlockSpec((row_tile, 1), lambda r, l: (r, 0))] * 2
        pool_scratch = [pltpu.VMEM((row_tile, 1), jnp.float32),
                        pltpu.VMEM((row_tile, 1), jnp.float32)]
        pool_sem = ("parallel", "arbitrary")

    sums, maxs = pl.pallas_call(
        pool_kernel,
        out_shape=(jax.ShapeDtypeStruct((R, 1), jnp.float32),
                   jax.ShapeDtypeStruct((R, 1), jnp.float32)),
        grid_spec=pltpu.PrefetchScalarGridSpec(
            num_scalar_prefetch=0,
            grid=pool_grid,
            in_specs=pool_in,
            out_specs=pool_out,
            scratch_shapes=pool_scratch,
        ),
        compiler_params=pltpu.CompilerParams(
            dimension_semantics=pool_sem, vmem_limit_bytes=vmem_limit),
    )(xr)

    # ---- tiny FC + sigmoid on pooled (B, C) stats ----------------------------
    # O(B*C*H) work on O(B*C) data: done in plain JAX between the two streaming
    # passes (negligible; the fused path keeps it in-kernel).
    avg = sums.reshape(B, C) * inv_l
    mx = maxs.reshape(B, C)
    ha = jnp.maximum(avg @ w1f.T, 0.0)
    hm = jnp.maximum(mx @ w1f.T, 0.0)
    att = jax.nn.sigmoid(ha @ w2f.T + hm @ w2f.T)              # (B, C) f32
    att_rows = att.reshape(R, 1)

    # ---- pass 2: re-stream x and apply the per-row gate ----------------------
    def apply_kernel(att_ref, x_ref, out_ref):
        xb = x_ref[...]
        g = att_ref[...].astype(xb.dtype)                      # (row_tile, 1)
        out_ref[...] = (xb * g).astype(out_ref.dtype)

    if nl == 1:
        apply_grid = (nr,)
        att_spec = pl.BlockSpec((row_tile, 1), lambda r: (r, 0))
        x_spec = pl.BlockSpec((row_tile, L), lambda r: (r, 0))
        apply_sem = ("parallel",)
    else:
        apply_grid = (nr, nl)
        att_spec = pl.BlockSpec((row_tile, 1), lambda r, l: (r, 0))
        x_spec = pl.BlockSpec((row_tile, l_tile), lambda r, l: (r, l))
        apply_sem = ("parallel", "parallel")

    out_rows = pl.pallas_call(
        apply_kernel,
        out_shape=jax.ShapeDtypeStruct((R, L), x.dtype),
        grid_spec=pltpu.PrefetchScalarGridSpec(
            num_scalar_prefetch=0,
            grid=apply_grid,
            in_specs=[att_spec, x_spec],
            out_specs=x_spec,
        ),
        compiler_params=pltpu.CompilerParams(
            dimension_semantics=apply_sem, vmem_limit_bytes=vmem_limit),
    )(att_rows, xr)

    return out_rows.reshape(B, C, L)


# --------------------------------- wrapper -----------------------------------

def channel_attention(x, w1, w2, *, b_tile=None, row_tile=None, l_tile=None,
                      force_two_pass=False):
    """x: (B, C, L); w1: (C//r, C) first Linear weight; w2: (C, C//r) second.

    If overriding tiles for the two-pass path, pass row_tile and l_tile
    together (row_tile divides B*C and is a multiple of 8 or == B*C; l_tile
    divides L and is a multiple of 128 or == L).
    """
    B, C, L = x.shape
    H = w1.shape[0]
    assert w1.shape == (H, C) and w2.shape == (C, H)

    # Weights are tiny: pre-cast to f32 once in the wrapper.
    w1f = w1.astype(jnp.float32)
    w2f = w2.astype(jnp.float32)

    itemsize = jnp.dtype(x.dtype).itemsize
    vmem_limit, block_budget = _vmem_budgets()

    # ---------------- fused single-pass path ----------------
    per_sample = C * L * itemsize
    # Sub-32-bit inputs get a halved fused budget: the f32 sum accumulation can
    # transiently widen the in-kernel working set.
    fused_budget = block_budget if itemsize >= 4 else block_budget // 2
    if (not force_two_pass) and per_sample <= fused_budget:
        if b_tile is None:
            cap = min(8, max(1, fused_budget // per_sample))
            if B >= 2:
                cap = min(cap, max(1, B // 2))   # keep nb >= 2 for v7x megacore
            b_tile = _largest_divisor(B, max(1, cap), 1) or 1
        assert B % b_tile == 0
        return _fused_call(x, w1f, w2f, b_tile, vmem_limit)

    # ---------------- two-pass row-streamed path ----------------
    R = B * C
    if row_tile is None or l_tile is None:
        # Prefer full-L row blocks (fully contiguous HBM reads, lane-dense).
        row_align = 8 * max(1, 4 // itemsize)        # 8 (f32) / 16 (bf16) / 32 (i8)
        cap_rows = max(1, block_budget // max(1, L * itemsize))
        rt = _largest_divisor(R, cap_rows, row_align)
        if rt is None:
            rt = _largest_divisor(R, cap_rows, 8)
        if rt is not None:
            row_tile, l_tile = rt, L
        else:
            # Rows too long for the budget: tile L as well (multiples of 128).
            row_tile = 8 if R % 8 == 0 else R
            cap_l = max(1, block_budget // max(1, row_tile * itemsize))
            lt = _largest_divisor(L, cap_l, 128)
            # TODO(synk): L with no 128-multiple divisor that fits the budget
            # would need masked/padded L tiles; fall back to full L here.
            l_tile = lt if lt is not None else L
    assert R % row_tile == 0 and L % l_tile == 0
    assert row_tile == R or row_tile % 8 == 0
    assert l_tile == L or l_tile % 128 == 0
    return _two_pass_call(x, w1f, w2f, row_tile, l_tile, vmem_limit)


# ------------------------------ pure-JAX reference ---------------------------

def channel_attention_ref(x, w1, w2):
    xf = x.astype(jnp.float32)
    avg = jnp.mean(xf, axis=-1)
    mx = jnp.max(xf, axis=-1)
    w1f = w1.astype(jnp.float32)
    w2f = w2.astype(jnp.float32)

    def fc(v):
        return jnp.maximum(v @ w1f.T, 0.0) @ w2f.T

    att = jax.nn.sigmoid(fc(avg) + fc(mx))
    return (xf * att[:, :, None]).astype(x.dtype)


if __name__ == "__main__":
    key = jax.random.PRNGKey(0)
    kx, k1, k2, kx2, kx3 = jax.random.split(key, 5)

    B, C, L, reduction = 2, 32, 16, 16
    H = C // reduction                       # hidden = 2
    x = jax.random.normal(kx, (B, C, L), dtype=jnp.float32)
    w1 = jax.random.normal(k1, (H, C), dtype=jnp.float32) * 0.1
    w2 = jax.random.normal(k2, (C, H), dtype=jnp.float32) * 0.1

    # 1) Fused single-pass path (small per-sample slab; nb >= 2).
    out = jax.block_until_ready(channel_attention(x, w1, w2))
    ref = channel_attention_ref(x, w1, w2)
    assert out.shape == (B, C, L)
    assert jnp.allclose(out, ref, atol=1e-3, rtol=1e-3), "fused path mismatch"

    # 2) Two-pass path, full-L contiguous row blocks.
    L2 = 512
    x2 = jax.random.normal(kx2, (B, C, L2), dtype=jnp.float32)
    ref2 = channel_attention_ref(x2, w1, w2)
    out2 = jax.block_until_ready(channel_attention(x2, w1, w2, force_two_pass=True))
    assert jnp.allclose(out2, ref2, atol=1e-3, rtol=1e-3), "two-pass (full-L) mismatch"

    # 3) Two-pass path with an L-tiled accumulating pool (nl > 1).
    out3 = jax.block_until_ready(
        channel_attention(x2, w1, w2, force_two_pass=True, row_tile=8, l_tile=128))
    assert jnp.allclose(out3, ref2, atol=1e-3, rtol=1e-3), "two-pass (L-tiled) mismatch"

    # 4) Fused path with a bf16 input and a batch tile > 1.
    x3 = jax.random.normal(kx3, (4, C, 256), dtype=jnp.float32).astype(jnp.bfloat16)
    out4 = jax.block_until_ready(channel_attention(x3, w1, w2))
    ref4 = channel_attention_ref(x3, w1, w2)
    assert jnp.allclose(out4.astype(jnp.float32), ref4.astype(jnp.float32),
                        atol=3e-2, rtol=3e-2), "fused bf16 path mismatch"

    print("KERNEL_OK")
</pallas_src>

<mosaic_0001>
module attributes {stable_mosaic.version = 11 : i64} {
  func.func @kernel(%arg0: i32, %arg1: memref<1x32x16xf32, #tpu.memory_space<vmem>>, %arg2: memref<2x32xf32, #tpu.memory_space<vmem>>, %arg3: memref<32x2xf32, #tpu.memory_space<vmem>>, %arg4: memref<1x32x16xf32, #tpu.memory_space<vmem>>) attributes {dimension_semantics = [#tpu.dimension_semantics<parallel>], iteration_bounds = array<i64: 2>, scalar_prefetch = 0 : i64, scratch_operands = 0 : i64, tpu.core_type = #tpu.core_type<tc>, window_params = [{transform_indices = @transform_0, window_bounds = array<i64: 1, 32, 16>}, {pipeline_mode = #tpu.pipeline_mode<synchronous>, transform_indices = @transform_1, window_bounds = array<i64: 2, 32>}, {pipeline_mode = #tpu.pipeline_mode<synchronous>, transform_indices = @transform_2, window_bounds = array<i64: 32, 2>}, {transform_indices = @transform_3, window_bounds = array<i64: 1, 32, 16>}]} {
    %c0 = arith.constant 0 : index
    %c0_0 = arith.constant 0 : index
    %0 = vector.load %arg2[%c0, %c0_0] : memref<2x32xf32, #tpu.memory_space<vmem>>, vector<2x32xf32>
    %c0_1 = arith.constant 0 : index
    %c0_2 = arith.constant 0 : index
    %1 = vector.load %arg3[%c0_1, %c0_2] : memref<32x2xf32, #tpu.memory_space<vmem>>, vector<32x2xf32>
    %c0_3 = arith.constant 0 : index
    %c0_4 = arith.constant 0 : index
    %c0_5 = arith.constant 0 : index
    %2 = vector.load %arg1[%c0_3, %c0_4, %c0_5] : memref<1x32x16xf32, #tpu.memory_space<vmem>>, vector<1x32x16xf32>
    %3 = vector.shape_cast %2 : vector<1x32x16xf32> to vector<32x16xf32>
    %cst = arith.constant dense<0.000000e+00> : vector<32xf32>
    %4 = vector.multi_reduction <add>, %3, %cst [1] : vector<32x16xf32> to vector<32xf32>
    %5 = vector.shape_cast %4 : vector<32xf32> to vector<32x1xf32>
    %cst_6 = arith.constant 6.250000e-02 : f32
    %6 = vector.broadcast %cst_6 : f32 to vector<32x1xf32>
    %7 = arith.mulf %5, %6 : vector<32x1xf32>
    %cst_7 = arith.constant dense<0xFF800000> : vector<32xf32>
    %8 = vector.multi_reduction <maximumf>, %3, %cst_7 [1] : vector<32x16xf32> to vector<32xf32>
    %9 = vector.shape_cast %8 : vector<32xf32> to vector<32x1xf32>
    %cst_8 = arith.constant dense<0.000000e+00> : vector<2x1xf32>
    %10 = tpu.matmul %0, %7, %cst_8 {dimension_numbers = #tpu.dot_dimension_numbers<[1], [0], [0], [1], [0, 0, 1, 1], [], []>} : vector<2x32xf32>, vector<32x1xf32>, vector<2x1xf32> -> vector<2x1xf32>
    %cst_9 = arith.constant 0.000000e+00 : f32
    %11 = vector.broadcast %cst_9 : f32 to vector<2x1xf32>
    %12 = arith.maximumf %10, %11 : vector<2x1xf32>
    %cst_10 = arith.constant dense<0.000000e+00> : vector<2x1xf32>
    %13 = tpu.matmul %0, %9, %cst_10 {dimension_numbers = #tpu.dot_dimension_numbers<[1], [0], [0], [1], [0, 0, 1, 1], [], []>} : vector<2x32xf32>, vector<32x1xf32>, vector<2x1xf32> -> vector<2x1xf32>
    %cst_11 = arith.constant 0.000000e+00 : f32
    %14 = vector.broadcast %cst_11 : f32 to vector<2x1xf32>
    %15 = arith.maximumf %13, %14 : vector<2x1xf32>
    %cst_12 = arith.constant dense<0.000000e+00> : vector<32x1xf32>
    %16 = tpu.matmul %1, %12, %cst_12 {dimension_numbers = #tpu.dot_dimension_numbers<[1], [0], [0], [1], [0, 0, 1, 1], [], []>} : vector<32x2xf32>, vector<2x1xf32>, vector<32x1xf32> -> vector<32x1xf32>
    %cst_13 = arith.constant dense<0.000000e+00> : vector<32x1xf32>
    %17 = tpu.matmul %1, %15, %cst_13 {dimension_numbers = #tpu.dot_dimension_numbers<[1], [0], [0], [1], [0, 0, 1, 1], [], []>} : vector<32x2xf32>, vector<2x1xf32>, vector<32x1xf32> -> vector<32x1xf32>
    %18 = arith.addf %16, %17 : vector<32x1xf32>
    %cst_14 = arith.constant -3.000000e+01 : f32
    %cst_15 = arith.constant 3.000000e+01 : f32
    %19 = vector.broadcast %cst_14 : f32 to vector<32x1xf32>
    %20 = arith.maximumf %19, %18 : vector<32x1xf32>
    %21 = vector.broadcast %cst_15 : f32 to vector<32x1xf32>
    %22 = arith.minimumf %21, %20 : vector<32x1xf32>
    %cst_16 = arith.constant 0.000000e+00 : f32
    %23 = vector.broadcast %cst_16 : f32 to vector<32x1xf32>
    %24 = arith.subf %23, %22 : vector<32x1xf32>
    %25 = math.exp %24 : vector<32x1xf32>
    %cst_17 = arith.constant 1.000000e+00 : f32
    %26 = vector.broadcast %cst_17 : f32 to vector<32x1xf32>
    %27 = arith.addf %26, %25 : vector<32x1xf32>
    %28 = tpu.reciprocal %27 {approx = true} : vector<32x1xf32> -> vector<32x1xf32>
    %29 = arith.mulf %27, %28 : vector<32x1xf32>
    %cst_18 = arith.constant 2.000000e+00 : f32
    %30 = vector.broadcast %cst_18 : f32 to vector<32x1xf32>
    %31 = arith.subf %30, %29 : vector<32x1xf32>
    %32 = arith.mulf %28, %31 : vector<32x1xf32>
    %33 = vector.broadcast %32 : vector<32x1xf32> to vector<32x16xf32>
    %34 = arith.mulf %3, %33 : vector<32x16xf32>
    %c0_19 = arith.constant 0 : index
    %c0_20 = arith.constant 0 : index
    %c0_21 = arith.constant 0 : index
    %35 = vector.load %arg4[%c0_19, %c0_20, %c0_21] : memref<1x32x16xf32, #tpu.memory_space<vmem>>, vector<1x32x16xf32>
    %36 = vector.shape_cast %35 : vector<1x32x16xf32> to vector<32x16xf32>
    %37 = vector.shape_cast %34 : vector<32x16xf32> to vector<1x32x16xf32>
    tpu.vector_store %arg4[%c0_19, %c0_20, %c0_21], %37 {strides = array<i32>} : memref<1x32x16xf32, #tpu.memory_space<vmem>>, vector<1x32x16xf32>,
    return
  }
  func.func @transform_0(%arg0: i32) -> (i32, i32, i32) {
    %c0_i32 = arith.constant 0 : i32
    %c0_i32_0 = arith.constant 0 : i32
    %c0_i32_1 = arith.constant 0 : i32
    return %arg0, %c0_i32, %c0_i32_0 : i32, i32, i32
  }
  func.func @transform_1(%arg0: i32) -> (i32, i32) {
    %c0_i32 = arith.constant 0 : i32
    %c0_i32_0 = arith.constant 0 : i32
    %c0_i32_1 = arith.constant 0 : i32
    return %c0_i32, %c0_i32_0 : i32, i32
  }
  func.func @transform_2(%arg0: i32) -> (i32, i32) {
    %c0_i32 = arith.constant 0 : i32
    %c0_i32_0 = arith.constant 0 : i32
    %c0_i32_1 = arith.constant 0 : i32
    return %c0_i32, %c0_i32_0 : i32, i32
  }
  func.func @transform_3(%arg0: i32) -> (i32, i32, i32) {
    %c0_i32 = arith.constant 0 : i32
    %c0_i32_0 = arith.constant 0 : i32
    %c0_i32_1 = arith.constant 0 : i32
    return %arg0, %c0_i32, %c0_i32_0 : i32, i32, i32
  }
}

</mosaic_0001>

<llo_original>
// kernel: tpu_custom_call.1
$region0: #{tpu_custom_call.1}
  #allocation0 [shape = 'u32[]', space=smem, size = 0x4, offset = 0x4, fixed_abs, tag = 'smem constant byte address 0x4 - core index']
  #allocation1 [shape = 'u32[144,128]{1,0:T(1,128)}', space=vmem, size = 0x12000, scoped, tag = 'internal scratch']
  %s0 = inlined_call_operand.vmem [shape: f32[2,32,16], index: 0, kind: input, shape index: {}]
  %s1 = inlined_call_operand.vmem [shape: f32[2,32], index: 1, kind: input, shape index: {}]
  %s2 = inlined_call_operand.vmem [shape: f32[32,2], index: 2, kind: input, shape index: {}]
  %s3 = inlined_call_operand.vmem [shape: f32[2,32,16], index: 3, kind: output, shape index: {}]
  %s4 = sld [smem:[#allocation0]]
  $region45: #{tpu_custom_call.1} parent=0
    _
  %s6 = ssub.s32 1, %s4
  %s7 = scalar_select 0, %s6, %s4
  loop: start=0, step=1, limit=4
  $region2: #{tpu_custom_call.1} parent=0 // loop_pre_header
    _
  $region3: #{tpu_custom_call.1} parent=0 // loop_header
    %s9 = sphi 0, %s13
    %p10 = scmp.ge.s32.totalorder %s9, 4
    %s19 = sphi 0, %s21
    %s22 = sphi 0, %s19
    %s23 = sphi 0, %s22
    %s39 = sphi 0, %s23
    %s43 = sphi 0, %s43
    %s45 = sphi 0, %s43
    %s46 = sphi 0, %s45
    %s60 = sphi 0, %s46
    %s64 = sphi 0, %s64
    %s66 = sphi 0, %s64
    %s67 = sphi 0, %s66
    %s81 = sphi 0, %s67
    %s87 = sphi 0, %s89
    %s90 = sphi 0, %s87
    %s91 = sphi 0, %s90
    %s107 = sphi 0, %s91
  $region4: #{tpu_custom_call.1} parent=0 // loop_header_branch
    %12 = sbr.rel (%p10) target = $region8
  $region5: #{tpu_custom_call.1} parent=0 // loop_body
    %s14 = ssub.s32 %s9, 1
    %s15 = ssub.s32 %s9, 2
    %s16 = sadd.s32 %s9, 1
    %s17 = ssub.s32 %s9, %s16
    %p18 = scmp.eq.s32.totalorder %s17, 0
    %s20 = sadd.s32 %s19, 1
    %s21 = scalar_select %p18, %s19, %s20
    %p24 = pneg %p18
    %p25 = scmp.eq.s32.totalorder %s9, 1
    %p26 = por %p24, %p25
    %p27 = scmp.ne.s32.totalorder %s19, %s22
    %p28 = scmp.eq.s32.totalorder %s9, 0
    %p29 = por %p27, %p28
    %p30 = scmp.ne.s32.totalorder %s19, %s22
    %p31 = scmp.eq.s32.totalorder %s14, 1
    %p32 = por %p30, %p31
    %p33 = scmp.ne.s32.totalorder %s22, %s23
    %p34 = scmp.eq.s32.totalorder %s14, 0
    %p35 = por %p33, %p34
    %p36 = scmp.ne.s32.totalorder %s22, %s23
    %p37 = scmp.eq.s32.totalorder %s15, 1
    %p38 = por %p36, %p37
    %p40 = scmp.ne.s32.totalorder %s23, %s39
    %p41 = scmp.eq.s32.totalorder %s15, 0
    %p42 = por %p40, %p41
    %s44 = sadd.s32 %s43, 1
    %p47 = scmp.eq.s32.totalorder %s9, 1
    %p48 = scmp.ne.s32.totalorder %s43, %s45
    %p49 = scmp.eq.s32.totalorder %s9, 0
    %p50 = por %p48, %p49
    %p51 = scmp.ne.s32.totalorder %s43, %s45
    %p52 = scmp.eq.s32.totalorder %s14, 1
    %p53 = por %p51, %p52
    %p54 = scmp.ne.s32.totalorder %s45, %s46
    %p55 = scmp.eq.s32.totalorder %s14, 0
    %p56 = por %p54, %p55
    %p57 = scmp.ne.s32.totalorder %s45, %s46
    %p58 = scmp.eq.s32.totalorder %s15, 1
    %p59 = por %p57, %p58
    %p61 = scmp.ne.s32.totalorder %s46, %s60
    %p62 = scmp.eq.s32.totalorder %s15, 0
    %p63 = por %p61, %p62
    %s65 = sadd.s32 %s64, 1
    %p68 = scmp.eq.s32.totalorder %s9, 1
    %p69 = scmp.ne.s32.totalorder %s64, %s66
    %p70 = scmp.eq.s32.totalorder %s9, 0
    %p71 = por %p69, %p70
    %p72 = scmp.ne.s32.totalorder %s64, %s66
    %p73 = scmp.eq.s32.totalorder %s14, 1
    %p74 = por %p72, %p73
    %p75 = scmp.ne.s32.totalorder %s66, %s67
    %p76 = scmp.eq.s32.totalorder %s14, 0
    %p77 = por %p75, %p76
    %p78 = scmp.ne.s32.totalorder %s66, %s67
    %p79 = scmp.eq.s32.totalorder %s15, 1
    %p80 = por %p78, %p79
    %p82 = scmp.ne.s32.totalorder %s67, %s81
    %p83 = scmp.eq.s32.totalorder %s15, 0
    %p84 = por %p82, %p83
    %s85 = ssub.s32 %s9, %s16
    %p86 = scmp.eq.s32.totalorder %s85, 0
    %s88 = sadd.s32 %s87, 1
    %s89 = scalar_select %p86, %s87, %s88
    %p92 = pneg %p86
    %p93 = scmp.eq.s32.totalorder %s9, 1
    %p94 = por %p92, %p93
    %p95 = scmp.ne.s32.totalorder %s87, %s90
    %p96 = scmp.eq.s32.totalorder %s9, 0
    %p97 = por %p95, %p96
    %p98 = scmp.ne.s32.totalorder %s87, %s90
    %p99 = scmp.eq.s32.totalorder %s14, 1
    %p100 = por %p98, %p99
    %p101 = scmp.ne.s32.totalorder %s90, %s91
    %p102 = scmp.eq.s32.totalorder %s14, 0
    %p103 = por %p101, %p102
    %p104 = scmp.ne.s32.totalorder %s90, %s91
    %p105 = scmp.eq.s32.totalorder %s15, 1
    %p106 = por %p104, %p105
    %p108 = scmp.ne.s32.totalorder %s91, %s107
    %p109 = scmp.eq.s32.totalorder %s15, 0
    %p110 = por %p108, %p109
    %p111 = scmp.le.s32.totalorder 1, %s9
    %p112 = scmp.lt.s32.totalorder %s9, 3
    %p113 = pnand %p111, %p112
    %p114 = pneg %p113
    // Predicated region
    $region9: #{tpu_custom_call.1} parent=5 // pred_check
      _
    $region10: #{tpu_custom_call.1} parent=5 // pred_check_branch
      %116 = sbr.rel (%p113) target = $region12
    $region11: #{tpu_custom_call.1} parent=5 // pred_region
      %s117 = ssub.s32 %s9, 1
      // Predicated region
      $region13: #{tpu_custom_call.1} parent=11 // pred_check
        %p118 = pneg %p56
      $region14: #{tpu_custom_call.1} parent=11 // pred_check_branch
        %120 = sbr.rel (%p118) target = $region16
      $region15: #{tpu_custom_call.1} parent=11 // pred_region
        _
      $region16: #{tpu_custom_call.1} parent=11 // pred_fallthru
        _
      // Predicated region
      $region17: #{tpu_custom_call.1} parent=11 // pred_check
        %p121 = pneg %p77
      $region18: #{tpu_custom_call.1} parent=11 // pred_check_branch
        %123 = sbr.rel (%p121) target = $region20
      $region19: #{tpu_custom_call.1} parent=11 // pred_region
        _
      $region20: #{tpu_custom_call.1} parent=11 // pred_fallthru
        _
    $region12: #{tpu_custom_call.1} parent=5 // pred_fallthru
      _
    %p124 = scmp.lt.s32.totalorder %s9, 2
    // Predicated region
    $region21: #{tpu_custom_call.1} parent=5 // pred_check
      %p125 = pneg %p124
    $region22: #{tpu_custom_call.1} parent=5 // pred_check_branch
      %127 = sbr.rel (%p125) target = $region24
    $region23: #{tpu_custom_call.1} parent=5 // pred_region
      // Predicated region
      $region25: #{tpu_custom_call.1} parent=23 // pred_check
        %p128 = pneg %p29
      $region26: #{tpu_custom_call.1} parent=23 // pred_check_branch
        %130 = sbr.rel (%p128) target = $region28
      $region27: #{tpu_custom_call.1} parent=23 // pred_region
        %p131 = scmp.lt.s32.totalorder %s9, 1
        %s132 = scalar_select %p131, %s9, 1
        %s133 = smul.addr %s132, 4
        %s134 = smul.addr %s133, 8
        %s135 = scalar_lea.vmem %s0, %s134
      $region28: #{tpu_custom_call.1} parent=23 // pred_fallthru
        _
    $region24: #{tpu_custom_call.1} parent=5 // pred_fallthru
      _
    %p136 = scmp.le.s32.totalorder 1, %s9
    %p137 = scmp.lt.s32.totalorder %s9, 3
    %p138 = pnand %p136, %p137
    %p139 = pneg %p138
    // Predicated region
    $region29: #{tpu_custom_call.1} parent=5 // pred_check
      _
    $region30: #{tpu_custom_call.1} parent=5 // pred_check_branch
      %141 = sbr.rel (%p138) target = $region32
    $region31: #{tpu_custom_call.1} parent=5 // pred_region
      %s142 = ssub.s32 %s9, 1
      %p143 = scmp.lt.s32.totalorder %s14, 1
      %s144 = scalar_select %p143, %s14, 1
      %s145 = smul.addr %s144, 4
      %s146 = smul.addr %s145, 8
      %s147 = scalar_lea.vmem %s0, %s146
      %p148 = pneg %p35
      %p149 = pneg %p32
      %p150 = pneg %p56
      %p151 = pneg %p53
      %p152 = pneg %p77
      %p153 = pneg %p74
      %p154 = pneg %p103
      %p155 = pneg %p100
      %p156 = scmp.lt.s32.totalorder %s14, 1
      %s157 = scalar_select %p156, %s14, 1
      %s158 = smul.addr %s157, 4
      %s159 = smul.addr %s158, 8
      %s160 = scalar_lea.vmem %s3, %s159
      %p161 = scmp.lt.s32.totalorder %s14, 1
      %s162 = scalar_select %p161, %s14, 1
      %s163 = smul.addr %s162, 4
      %s164 = smul.addr %s163, 8
      %s165 = scalar_lea.vmem %s0, %s164
      %p166 = scmp.lt.s32.totalorder %s14, 1
      %s167 = scalar_select %p166, %s14, 1
      %s168 = smul.addr %s167, 4
      %s169 = smul.addr %s168, 8
      %s170 = scalar_lea.vmem %s3, %s169
      %v171 = vld [vmem:[%s1] sm:$0x3]
      %v172 = vld [vmem:[%s2] sm:$0xff]
      %v173 = vld [vmem:[%s2 + $0x8] sm:$0xff]
      %v174 = vld [vmem:[%s2 + $0x10] sm:$0xff]
      %v175 = vld [vmem:[%s2 + $0x18] sm:$0xff]
      %v176 = vld [vmem:[%s165] sm:$0xff]
      %v177 = vld [vmem:[%s165 + $0x8] sm:$0xff]
      %v178 = vld [vmem:[%s165 + $0x10] sm:$0xff]
      %v179 = vld [vmem:[%s165 + $0x18] sm:$0xff]
      %vm180 = vcmask 130048
      %v181 = vsel %vm180, %v176, 0.0
      %182 = vadd.xlane.f32.xlu0 %v181
      %v183 = vpop.xlane.xlu0 %182
      %v184 = vsel %vm180, %v177, 0.0
      %185 = vadd.xlane.f32.xlu0 %v184
      %v186 = vpop.xlane.xlu0 %185
      %v187 = vsel %vm180, %v178, 0.0
      %188 = vadd.xlane.f32.xlu0 %v187
      %v189 = vpop.xlane.xlu0 %188
      %v190 = vsel %vm180, %v179, 0.0
      %191 = vadd.xlane.f32.xlu0 %v190
      %v192 = vpop.xlane.xlu0 %191
      %v193 = vmul.f32 %v183, 0.0625
      %v194 = vmul.f32 %v186, 0.0625
      %v195 = vmul.f32 %v189, 0.0625
      %v196 = vmul.f32 %v192, 0.0625
      %v197 = vsel %vm180, %v176, -inf
      %198 = vmax.xlane.f32.xlu0 %v197
      %v199 = vpop.xlane.xlu0 %198
      %v200 = vsel %vm180, %v177, -inf
      %201 = vmax.xlane.f32.xlu0 %v200
      %v202 = vpop.xlane.xlu0 %201
      %v203 = vsel %vm180, %v178, -inf
      %204 = vmax.xlane.f32.xlu0 %v203
      %v205 = vpop.xlane.xlu0 %204
      %v206 = vsel %vm180, %v179, -inf
      %207 = vmax.xlane.f32.xlu0 %v206
      %v208 = vpop.xlane.xlu0 %207
      %vm209 = vcmask 261120
      %v211 = vsel %vm209, %v171, 0
      %213 = vmatprep.subr.mxu0 0.0
      %214 = vmatpush1.msra.mxu0 0.0
      %215 = vmatprep.subr.mxu0 0.0
      %216 = vmatpush1.msra.mxu0 0.0
      %217 = vmatprep.subr.mxu0 0.0
      %218 = vmatpush1.msra.mxu0 0.0
      %219 = vmatprep.subr.mxu0 0.0
      %220 = vmatpush1.msra.mxu0 0.0
      %221 = vmatprep.subr.mxu0 0.0
      %222 = vmatpush1.msra.mxu0 0.0
      %223 = vmatprep.subr.mxu0 0.0
      %224 = vmatpush1.msra.mxu0 0.0
      %225 = vmatprep.subr.mxu0 0.0
      %226 = vmatpush1.msra.mxu0 0.0
      %227 = vmatprep.subr.mxu0 0.0
      %228 = vmatpush1.msra.mxu0 0.0
      %229 = vmatprep.subr.mxu0 0.0
      %230 = vmatpush1.msra.mxu0 0.0
      %231 = vmatprep.subr.mxu0 0.0
      %232 = vmatpush1.msra.mxu0 0.0
      %233 = vmatprep.subr.mxu0 0.0
      %234 = vmatpush1.msra.mxu0 0.0
      %235 = vmatprep.subr.mxu0 0.0
      %236 = vmatpush1.msra.mxu0 0.0
      %237 = vmatprep.subr.mxu0 0.0
      %238 = vmatpush1.msra.mxu0 %v196
      %239 = vmatprep.subr.mxu0 0.0
      %240 = vmatpush1.msra.mxu0 %v195
      %241 = vmatprep.subr.mxu0 0.0
      %242 = vmatpush1.msra.mxu0 %v194
      %243 = vmatprep.subr.mxu0 0.0
      %244 = vmatpush1.msra.mxu0 %v193
      %245 = vmatprep.subr.mxu0 0.0
      %246 = vmatpush2.msra.mxu0 0.0
      %247 = vmatprep.subr.mxu0 0.0
      %248 = vmatpush2.msra.mxu0 0.0
      %249 = vmatprep.subr.mxu0 0.0
      %250 = vmatpush2.msra.mxu0 0.0
      %251 = vmatprep.subr.mxu0 0.0
      %252 = vmatpush2.msra.mxu0 0.0
      %253 = vmatprep.subr.mxu0 0.0
      %254 = vmatpush2.msra.mxu0 0.0
      %255 = vmatprep.subr.mxu0 0.0
      %256 = vmatpush2.msra.mxu0 0.0
      %257 = vmatprep.subr.mxu0 0.0
      %258 = vmatpush2.msra.mxu0 0.0
      %259 = vmatprep.subr.mxu0 0.0
      %260 = vmatpush2.msra.mxu0 0.0
      %261 = vmatprep.subr.mxu0 0.0
      %262 = vmatpush2.msra.mxu0 0.0
      %263 = vmatprep.subr.mxu0 0.0
      %264 = vmatpush2.msra.mxu0 0.0
      %265 = vmatprep.subr.mxu0 0.0
      %266 = vmatpush2.msra.mxu0 0.0
      %267 = vmatprep.subr.mxu0 0.0
      %268 = vmatpush2.msra.mxu0 0.0
      %269 = vmatprep.subr.mxu0 0.0
      %270 = vmatpush2.msra.mxu0 0.0
      %271 = vmatprep.subr.mxu0 0.0
      %272 = vmatpush2.msra.mxu0 0.0
      %273 = vmatprep.subr.mxu0 0.0
      %274 = vmatpush2.msra.mxu0 0.0
      %275 = vmatprep.subr.mxu0 0.0
      %276 = vmatpush2.msra.mxu0 0.0
      %277 = vmatprep.mubr.f32.mxu0 0.0
      %278 = vmatmul.mubr.f32.gmra.mxu0 %v211
      %v279 = vpop.f32.mrf.mxu0
      %v280 = vadd.f32 0.0, %v279
      %v281 = vpop.f32.mrf.mxu0
      %282 = vdwg.mxu0
      %v283 = vmax.f32 %v280, 0.0
      %284 = vmatprep.subr.mxu0 0.0
      %285 = vmatpush1.msra.mxu0 0.0
      %286 = vmatprep.subr.mxu0 0.0
      %287 = vmatpush1.msra.mxu0 0.0
      %288 = vmatprep.subr.mxu0 0.0
      %289 = vmatpush1.msra.mxu0 0.0
      %290 = vmatprep.subr.mxu0 0.0
      %291 = vmatpush1.msra.mxu0 0.0
      %292 = vmatprep.subr.mxu0 0.0
      %293 = vmatpush1.msra.mxu0 0.0
      %294 = vmatprep.subr.mxu0 0.0
      %295 = vmatpush1.msra.mxu0 0.0
      %296 = vmatprep.subr.mxu0 0.0
      %297 = vmatpush1.msra.mxu0 0.0
      %298 = vmatprep.subr.mxu0 0.0
      %299 = vmatpush1.msra.mxu0 0.0
      %300 = vmatprep.subr.mxu0 0.0
      %301 = vmatpush1.msra.mxu0 0.0
      %302 = vmatprep.subr.mxu0 0.0
      %303 = vmatpush1.msra.mxu0 0.0
      %304 = vmatprep.subr.mxu0 0.0
      %305 = vmatpush1.msra.mxu0 0.0
      %306 = vmatprep.subr.mxu0 0.0
      %307 = vmatpush1.msra.mxu0 0.0
      %308 = vmatprep.subr.mxu0 0.0
      %309 = vmatpush1.msra.mxu0 %v208
      %310 = vmatprep.subr.mxu0 0.0
      %311 = vmatpush1.msra.mxu0 %v205
      %312 = vmatprep.subr.mxu0 0.0
      %313 = vmatpush1.msra.mxu0 %v202
      %314 = vmatprep.subr.mxu0 0.0
      %315 = vmatpush1.msra.mxu0 %v199
      %316 = vmatprep.subr.mxu0 0.0
      %317 = vmatpush2.msra.mxu0 0.0
      %318 = vmatprep.subr.mxu0 0.0
      %319 = vmatpush2.msra.mxu0 0.0
      %320 = vmatprep.subr.mxu0 0.0
      %321 = vmatpush2.msra.mxu0 0.0
      %322 = vmatprep.subr.mxu0 0.0
      %323 = vmatpush2.msra.mxu0 0.0
      %324 = vmatprep.subr.mxu0 0.0
      %325 = vmatpush2.msra.mxu0 0.0
      %326 = vmatprep.subr.mxu0 0.0
      %327 = vmatpush2.msra.mxu0 0.0
      %328 = vmatprep.subr.mxu0 0.0
      %329 = vmatpush2.msra.mxu0 0.0
      %330 = vmatprep.subr.mxu0 0.0
      %331 = vmatpush2.msra.mxu0 0.0
      %332 = vmatprep.subr.mxu0 0.0
      %333 = vmatpush2.msra.mxu0 0.0
      %334 = vmatprep.subr.mxu0 0.0
      %335 = vmatpush2.msra.mxu0 0.0
      %336 = vmatprep.subr.mxu0 0.0
      %337 = vmatpush2.msra.mxu0 0.0
      %338 = vmatprep.subr.mxu0 0.0
      %339 = vmatpush2.msra.mxu0 0.0
      %340 = vmatprep.subr.mxu0 0.0
      %341 = vmatpush2.msra.mxu0 0.0
      %342 = vmatprep.subr.mxu0 0.0
      %343 = vmatpush2.msra.mxu0 0.0
      %344 = vmatprep.subr.mxu0 0.0
      %345 = vmatpush2.msra.mxu0 0.0
      %346 = vmatprep.subr.mxu0 0.0
      %347 = vmatpush2.msra.mxu0 0.0
      %348 = vmatprep.mubr.f32.mxu0 0.0
      %349 = vmatmul.mubr.f32.gmra.mxu0 %v211
      %v350 = vpop.f32.mrf.mxu0
      %v351 = vadd.f32 0.0, %v350
      %v352 = vpop.f32.mrf.mxu0
      %353 = vdwg.mxu0
      %v354 = vmax.f32 %v351, 0.0
      %vm355 = vcmask 15360
      %v357 = vsel %vm355, %v172, 0
      %v360 = vsel %vm355, %v173, 0
      %v363 = vsel %vm355, %v174, 0
      %v366 = vsel %vm355, %v175, 0
      %vm368 = vcmask 1041408
      %v370 = vsel %vm368, %v354, 0
      %372 = vmatprep.subr.mxu0 0.0
      %373 = vmatpush1.msra.mxu0 0.0
      %374 = vmatprep.subr.mxu0 0.0
      %375 = vmatpush1.msra.mxu0 0.0
      %376 = vmatprep.subr.mxu0 0.0
      %377 = vmatpush1.msra.mxu0 0.0
      %378 = vmatprep.subr.mxu0 0.0
      %379 = vmatpush1.msra.mxu0 0.0
      %380 = vmatprep.subr.mxu0 0.0
      %381 = vmatpush1.msra.mxu0 0.0
      %382 = vmatprep.subr.mxu0 0.0
      %383 = vmatpush1.msra.mxu0 0.0
      %384 = vmatprep.subr.mxu0 0.0
      %385 = vmatpush1.msra.mxu0 0.0
      %386 = vmatprep.subr.mxu0 0.0
      %387 = vmatpush1.msra.mxu0 0.0
      %388 = vmatprep.subr.mxu0 0.0
      %389 = vmatpush1.msra.mxu0 0.0
      %390 = vmatprep.subr.mxu0 0.0
      %391 = vmatpush1.msra.mxu0 0.0
      %392 = vmatprep.subr.mxu0 0.0
      %393 = vmatpush1.msra.mxu0 0.0
      %394 = vmatprep.subr.mxu0 0.0
      %395 = vmatpush1.msra.mxu0 0.0
      %396 = vmatprep.subr.mxu0 0.0
      %397 = vmatpush1.msra.mxu0 0.0
      %398 = vmatprep.subr.mxu0 0.0
      %399 = vmatpush1.msra.mxu0 0.0
      %400 = vmatprep.subr.mxu0 0.0
      %401 = vmatpush1.msra.mxu0 0.0
      %402 = vmatprep.subr.mxu0 0.0
      %403 = vmatpush1.msra.mxu0 %v370
      %404 = vmatprep.subr.mxu0 0.0
      %405 = vmatpush2.msra.mxu0 0.0
      %406 = vmatprep.subr.mxu0 0.0
      %407 = vmatpush2.msra.mxu0 0.0
      %408 = vmatprep.subr.mxu0 0.0
      %409 = vmatpush2.msra.mxu0 0.0
      %410 = vmatprep.subr.mxu0 0.0
      %411 = vmatpush2.msra.mxu0 0.0
      %412 = vmatprep.subr.mxu0 0.0
      %413 = vmatpush2.msra.mxu0 0.0
      %414 = vmatprep.subr.mxu0 0.0
      %415 = vmatpush2.msra.mxu0 0.0
      %416 = vmatprep.subr.mxu0 0.0
      %417 = vmatpush2.msra.mxu0 0.0
      %418 = vmatprep.subr.mxu0 0.0
      %419 = vmatpush2.msra.mxu0 0.0
      %420 = vmatprep.subr.mxu0 0.0
      %421 = vmatpush2.msra.mxu0 0.0
      %422 = vmatprep.subr.mxu0 0.0
      %423 = vmatpush2.msra.mxu0 0.0
      %424 = vmatprep.subr.mxu0 0.0
      %425 = vmatpush2.msra.mxu0 0.0
      %426 = vmatprep.subr.mxu0 0.0
      %427 = vmatpush2.msra.mxu0 0.0
      %428 = vmatprep.subr.mxu0 0.0
      %429 = vmatpush2.msra.mxu0 0.0
      %430 = vmatprep.subr.mxu0 0.0
      %431 = vmatpush2.msra.mxu0 0.0
      %432 = vmatprep.subr.mxu0 0.0
      %433 = vmatpush2.msra.mxu0 0.0
      %434 = vmatprep.subr.mxu0 0.0
      %435 = vmatpush2.msra.mxu0 0.0
      %436 = vmatprep.mubr.f32.mxu0 0.0
      %437 = vmatmul.mubr.f32.gmra.mxu0 %v357
      %v438 = vpop.f32.mrf.mxu0
      %v439 = vadd.f32 0.0, %v438
      %v440 = vpop.f32.mrf.mxu0
      %441 = vmatprep.mubr.f32.mxu0 0.0
      %442 = vmatmul.mubr.f32.gmra.mxu0 %v360
      %v443 = vpop.f32.mrf.mxu0
      %v444 = vadd.f32 0.0, %v443
      %v445 = vpop.f32.mrf.mxu0
      %446 = vmatprep.mubr.f32.mxu0 0.0
      %447 = vmatmul.mubr.f32.gmra.mxu0 %v363
      %v448 = vpop.f32.mrf.mxu0
      %v449 = vadd.f32 0.0, %v448
      %v450 = vpop.f32.mrf.mxu0
      %451 = vmatprep.mubr.f32.mxu0 0.0
      %452 = vmatmul.mubr.f32.gmra.mxu0 %v366
      %v453 = vpop.f32.mrf.mxu0
      %v454 = vadd.f32 0.0, %v453
      %v455 = vpop.f32.mrf.mxu0
      %456 = vdwg.mxu0
      %v458 = vsel %vm368, %v283, 0
      %460 = vmatprep.subr.mxu0 0.0
      %461 = vmatpush1.msra.mxu0 0.0
      %462 = vmatprep.subr.mxu0 0.0
      %463 = vmatpush1.msra.mxu0 0.0
      %464 = vmatprep.subr.mxu0 0.0
      %465 = vmatpush1.msra.mxu0 0.0
      %466 = vmatprep.subr.mxu0 0.0
      %467 = vmatpush1.msra.mxu0 0.0
      %468 = vmatprep.subr.mxu0 0.0
      %469 = vmatpush1.msra.mxu0 0.0
      %470 = vmatprep.subr.mxu0 0.0
      %471 = vmatpush1.msra.mxu0 0.0
      %472 = vmatprep.subr.mxu0 0.0
      %473 = vmatpush1.msra.mxu0 0.0
      %474 = vmatprep.subr.mxu0 0.0
      %475 = vmatpush1.msra.mxu0 0.0
      %476 = vmatprep.subr.mxu0 0.0
      %477 = vmatpush1.msra.mxu0 0.0
      %478 = vmatprep.subr.mxu0 0.0
      %479 = vmatpush1.msra.mxu0 0.0
      %480 = vmatprep.subr.mxu0 0.0
      %481 = vmatpush1.msra.mxu0 0.0
      %482 = vmatprep.subr.mxu0 0.0
      %483 = vmatpush1.msra.mxu0 0.0
      %484 = vmatprep.subr.mxu0 0.0
      %485 = vmatpush1.msra.mxu0 0.0
      %486 = vmatprep.subr.mxu0 0.0
      %487 = vmatpush1.msra.mxu0 0.0
      %488 = vmatprep.subr.mxu0 0.0
      %489 = vmatpush1.msra.mxu0 0.0
      %490 = vmatprep.subr.mxu0 0.0
      %491 = vmatpush1.msra.mxu0 %v458
      %492 = vmatprep.subr.mxu0 0.0
      %493 = vmatpush2.msra.mxu0 0.0
      %494 = vmatprep.subr.mxu0 0.0
      %495 = vmatpush2.msra.mxu0 0.0
      %496 = vmatprep.subr.mxu0 0.0
      %497 = vmatpush2.msra.mxu0 0.0
      %498 = vmatprep.subr.mxu0 0.0
      %499 = vmatpush2.msra.mxu0 0.0
      %500 = vmatprep.subr.mxu0 0.0
      %501 = vmatpush2.msra.mxu0 0.0
      %502 = vmatprep.subr.mxu0 0.0
      %503 = vmatpush2.msra.mxu0 0.0
      %504 = vmatprep.subr.mxu0 0.0
      %505 = vmatpush2.msra.mxu0 0.0
      %506 = vmatprep.subr.mxu0 0.0
      %507 = vmatpush2.msra.mxu0 0.0
      %508 = vmatprep.subr.mxu0 0.0
      %509 = vmatpush2.msra.mxu0 0.0
      %510 = vmatprep.subr.mxu0 0.0
      %511 = vmatpush2.msra.mxu0 0.0
      %512 = vmatprep.subr.mxu0 0.0
      %513 = vmatpush2.msra.mxu0 0.0
      %514 = vmatprep.subr.mxu0 0.0
      %515 = vmatpush2.msra.mxu0 0.0
      %516 = vmatprep.subr.mxu0 0.0
      %517 = vmatpush2.msra.mxu0 0.0
      %518 = vmatprep.subr.mxu0 0.0
      %519 = vmatpush2.msra.mxu0 0.0
      %520 = vmatprep.subr.mxu0 0.0
      %521 = vmatpush2.msra.mxu0 0.0
      %522 = vmatprep.subr.mxu0 0.0
      %523 = vmatpush2.msra.mxu0 0.0
      %524 = vmatprep.mubr.f32.mxu0 0.0
      %525 = vmatmul.mubr.f32.gmra.mxu0 %v357
      %v526 = vpop.f32.mrf.mxu0
      %v527 = vadd.f32 %v439, %v526
      %v528 = vpop.f32.mrf.mxu0
      %529 = vmatprep.mubr.f32.mxu0 0.0
      %530 = vmatmul.mubr.f32.gmra.mxu0 %v360
      %v531 = vpop.f32.mrf.mxu0
      %v532 = vadd.f32 %v444, %v531
      %v533 = vpop.f32.mrf.mxu0
      %534 = vmatprep.mubr.f32.mxu0 0.0
      %535 = vmatmul.mubr.f32.gmra.mxu0 %v363
      %v536 = vpop.f32.mrf.mxu0
      %v537 = vadd.f32 %v449, %v536
      %v538 = vpop.f32.mrf.mxu0
      %539 = vmatprep.mubr.f32.mxu0 0.0
      %540 = vmatmul.mubr.f32.gmra.mxu0 %v366
      %v541 = vpop.f32.mrf.mxu0
      %v542 = vadd.f32 %v454, %v541
      %v543 = vpop.f32.mrf.mxu0
      %544 = vdwg.mxu0
      %v545 = vmax.f32 %v527, -30.0
      %v546 = vmax.f32 %v532, -30.0
      %v547 = vmax.f32 %v537, -30.0
      %v548 = vmax.f32 %v542, -30.0
      %v549 = vmin.f32 %v545, 30.0
      %v550 = vmin.f32 %v546, 30.0
      %v551 = vmin.f32 %v547, 30.0
      %v552 = vmin.f32 %v548, 30.0
      %v553 = vsub.f32 0.0, %v549
      %v554 = vsub.f32 0.0, %v550
      %v555 = vsub.f32 0.0, %v551
      %v556 = vsub.f32 0.0, %v552
      %v557 = vmul.f32 %v553, 1.442695
      %v558 = vpow.pop %v557
      %v559 = vmul.f32 %v554, 1.442695
      %v560 = vpow.pop %v559
      %v561 = vmul.f32 %v555, 1.442695
      %v562 = vpow.pop %v561
      %v563 = vmul.f32 %v556, 1.442695
      %v564 = vpow.pop %v563
      %v565 = vadd.f32 %v558, 1.0
      %v566 = vadd.f32 %v560, 1.0
      %v567 = vadd.f32 %v562, 1.0
      %v568 = vadd.f32 %v564, 1.0
      %v569 = vrcp.pop %v565
      %v570 = vrcp.pop %v566
      %v571 = vrcp.pop %v567
      %v572 = vrcp.pop %v568
      %v573 = vmul.f32 %v565, %v569
      %v574 = vmul.f32 %v566, %v570
      %v575 = vmul.f32 %v567, %v571
      %v576 = vmul.f32 %v568, %v572
      %v577 = vsub.f32 2.0, %v573
      %v578 = vsub.f32 2.0, %v574
      %v579 = vsub.f32 2.0, %v575
      %v580 = vsub.f32 2.0, %v576
      %v581 = vmul.f32 %v569, %v577
      %v582 = vmul.f32 %v570, %v578
      %v583 = vmul.f32 %v571, %v579
      %v584 = vmul.f32 %v572, %v580
      %586 = vset.pattern.permute.xlu0 0
      %587 = vperm.xlu0 %586, %v581
      %v588 = vpop.permute.xlu0 %587
      %591 = vset.pattern.permute.xlu0 0
      %592 = vperm.xlu0 %591, %v582
      %v593 = vpop.permute.xlu0 %592
      %596 = vset.pattern.permute.xlu0 0
      %597 = vperm.xlu0 %596, %v583
      %v598 = vpop.permute.xlu0 %597
      %601 = vset.pattern.permute.xlu0 0
      %602 = vperm.xlu0 %601, %v584
      %v603 = vpop.permute.xlu0 %602
      %v605 = vmul.f32 %v176, %v588
      %v606 = vmul.f32 %v177, %v593
      %v607 = vmul.f32 %v178, %v598
      %v608 = vmul.f32 %v179, %v603
      %609 = vst.msk [vmem:[%s170] sm:$0xff] %vm180, %v605
      %610 = vst.msk [vmem:[%s170 + $0x8] sm:$0xff] %vm180, %v606
      %611 = vst.msk [vmem:[%s170 + $0x10] sm:$0xff] %vm180, %v607
      %612 = vst.msk [vmem:[%s170 + $0x18] sm:$0xff] %vm180, %v608
      %p613 = scmp.lt.s32.totalorder %s14, 1
      %s614 = scalar_select %p613, %s14, 1
      %s615 = smul.addr %s614, 4
      %s616 = smul.addr %s615, 8
      %s617 = scalar_lea.vmem %s3, %s616
      // Predicated region
      $region33: #{tpu_custom_call.1} parent=31 // pred_check
        %p618 = pneg %p100
      $region34: #{tpu_custom_call.1} parent=31 // pred_check_branch
        %620 = sbr.rel (%p618) target = $region36
      $region35: #{tpu_custom_call.1} parent=31 // pred_region
        _
      $region36: #{tpu_custom_call.1} parent=31 // pred_fallthru
        _
    $region32: #{tpu_custom_call.1} parent=5 // pred_fallthru
      _
    %p621 = scmp.le.s32.totalorder 2, %s9
    // Predicated region
    $region37: #{tpu_custom_call.1} parent=5 // pred_check
      %p622 = pneg %p621
    $region38: #{tpu_custom_call.1} parent=5 // pred_check_branch
      %624 = sbr.rel (%p622) target = $region40
    $region39: #{tpu_custom_call.1} parent=5 // pred_region
      %s625 = ssub.s32 %s9, 2
      // Predicated region
      $region41: #{tpu_custom_call.1} parent=39 // pred_check
        %p626 = pneg %p106
      $region42: #{tpu_custom_call.1} parent=39 // pred_check_branch
        %628 = sbr.rel (%p626) target = $region44
      $region43: #{tpu_custom_call.1} parent=39 // pred_region
        %p629 = scmp.lt.s32.totalorder %s15, 1
        %s630 = scalar_select %p629, %s15, 1
        %s631 = smul.addr %s630, 4
        %s632 = smul.addr %s631, 8
        %s633 = scalar_lea.vmem %s3, %s632
      $region44: #{tpu_custom_call.1} parent=39 // pred_fallthru
        _
    $region40: #{tpu_custom_call.1} parent=5 // pred_fallthru
      _
  $region6: #{tpu_custom_call.1} parent=0 // loop_footer
    %s13 = sadd.s32 1, %s9
  $region7: #{tpu_custom_call.1} parent=0 // loop_footer_branch
    %8 = sbr.rel target = $region3
  $region8: #{tpu_custom_call.1} parent=0 // loop_exit
    _

</llo_original>
